<compile_context>
chip_gen: v7x
topology: tpu7x:2x2x1
jax: 0.10.0
libtpu: 0.0.40
codegen_flags: <defaults>
</compile_context>

<pallas_src>
import functools

import jax
import jax.numpy as jnp
from jax.experimental import pallas as pl
from jax.experimental.pallas import tpu as pltpu


def _round_up(x, m):
    return ((x + m - 1) // m) * m


def _ddpg_value_kernel(h0_size, h1_size,
                       state_ref, action_ref,
                       w0_ref, w1x_ref, w1a_ref,
                       frow_ref,
                       out_ref):
    # f32 param slab layout: [ b0 (H0) | b1 (H1) | w2_row (H1) | b2 (1) ]
    frow = frow_ref[...]                                   # (1, H0 + 2*H1 + 1)
    b0 = frow[:, :h0_size]
    b1 = frow[:, h0_size:h0_size + h1_size]
    w2 = frow[:, h0_size + h1_size:h0_size + 2 * h1_size]
    b2 = frow[:, h0_size + 2 * h1_size:]

    # Layer 0: Linear(obs -> H0) + ReLU.  bf16 operands, f32 MXU accumulation.
    h0 = jnp.dot(state_ref[...], w0_ref[...],
                 preferred_element_type=jnp.float32) + b0
    h0 = jnp.maximum(h0, 0.0)

    # Layer 1: Linear(H0 + act -> H1) + ReLU.
    # torch.cat([h0, action], dim=1) @ W1^T == h0 @ W1x + action @ W1a
    h1 = (jnp.dot(h0.astype(jnp.bfloat16), w1x_ref[...],
                  preferred_element_type=jnp.float32)
          + jnp.dot(action_ref[...], w1a_ref[...],
                    preferred_element_type=jnp.float32)
          + b1)
    h1 = jnp.maximum(h1, 0.0)

    # Final layer: Linear(H1 -> 1).  An N=1 matmul uses 1/256 of the MXU output
    # width; do it on the VPU/XLU instead: broadcast-multiply + lane reduction.
    out = jnp.sum(h1 * w2, axis=-1, keepdims=True) + b2
    # TODO(synk): if profiling ever shows the (TB,1) writeback exposed at huge B,
    # emit a lane-dense output slab instead of a 1-lane column.
    out_ref[...] = out.astype(out_ref.dtype)


def ddpg_value_forward(state, action, params, *, block_b=256):
    """state: (B, obs) f32, action: (B, act) f32 -> (B, 1) f32."""
    w0, b0, w1x, w1a, b1, w2, b2 = params
    B, obs = state.shape
    act = action.shape[1]
    h0_size = w0.shape[1]
    h1_size = w1x.shape[1]

    # bf16 MXU operands (f32 accumulation inside the kernel); halves DMA bytes.
    state_bf = state.astype(jnp.bfloat16)
    action_bf = action.astype(jnp.bfloat16)
    w0_bf = w0.astype(jnp.bfloat16)
    w1x_bf = w1x.astype(jnp.bfloat16)
    w1a_bf = w1a.astype(jnp.bfloat16)

    # Pack all small f32 row-params into one slab -> fewer operands / DMAs.
    frow = jnp.concatenate(
        [b0.reshape(1, h0_size),
         b1.reshape(1, h1_size),
         w2.reshape(1, h1_size),
         b2.reshape(1, 1)], axis=1).astype(jnp.float32)
    frow_w = frow.shape[1]

    # Batch tile: multiple of 16 (bf16 sublane packing), clamped to padded B.
    tb = max(16, min(_round_up(block_b, 16), _round_up(B, 16)))
    b_pad = _round_up(B, tb)
    if b_pad != B:
        state_bf = jnp.pad(state_bf, ((0, b_pad - B), (0, 0)))
        action_bf = jnp.pad(action_bf, ((0, b_pad - B), (0, 0)))

    grid = (b_pad // tb,)
    kernel = functools.partial(_ddpg_value_kernel, h0_size, h1_size)

    out = pl.pallas_call(
        kernel,
        out_shape=jax.ShapeDtypeStruct((b_pad, 1), jnp.float32),
        grid_spec=pltpu.PrefetchScalarGridSpec(
            num_scalar_prefetch=0,
            grid=grid,
            in_specs=[
                # activations: blocked over batch (pipelined tile-by-tile)
                pl.BlockSpec((tb, obs), lambda i: (i, 0)),
                pl.BlockSpec((tb, act), lambda i: (i, 0)),
                # weights / param slab: constant index map -> VMEM-resident
                pl.BlockSpec((obs, h0_size), lambda i: (0, 0)),
                pl.BlockSpec((h0_size, h1_size), lambda i: (0, 0)),
                pl.BlockSpec((act, h1_size), lambda i: (0, 0)),
                pl.BlockSpec((1, frow_w), lambda i: (0, 0)),
            ],
            out_specs=pl.BlockSpec((tb, 1), lambda i: (i, 0)),
        ),
        compiler_params=pltpu.CompilerParams(
            dimension_semantics=("parallel",)),
    )(state_bf, action_bf, w0_bf, w1x_bf, w1a_bf, frow)
    return out[:B]


def _torch_like_linear_init(key, fan_in, fan_out):
    """Mimics nn.Linear default init: U(-1/sqrt(in), 1/sqrt(in)); weight stored (in, out)."""
    kw, kb = jax.random.split(key)
    bound = 1.0 / jnp.sqrt(jnp.float32(fan_in))
    w = jax.random.uniform(kw, (fan_in, fan_out), jnp.float32, -bound, bound)
    b = jax.random.uniform(kb, (1, fan_out), jnp.float32, -bound, bound)
    return w, b


def make_params(key, obs_size, act_size, hidden_layers):
    h0, h1 = hidden_layers
    k0, k1, k2 = jax.random.split(key, 3)
    w0, b0 = _torch_like_linear_init(k0, obs_size, h0)
    # Layer 1: Linear(h0 + act, h1); split its (in, out) weight into the rows
    # acting on x (first h0) and the rows acting on action (last act).
    w1_full, b1 = _torch_like_linear_init(k1, h0 + act_size, h1)
    w1x = w1_full[:h0, :]
    w1a = w1_full[h0:, :]
    w2, b2 = _torch_like_linear_init(k2, h1, 1)
    return (w0, b0, w1x, w1a, b1, w2, b2)


def reference_forward(state, action, params):
    """Pure-JAX f32 reference matching the PyTorch forward."""
    w0, b0, w1x, w1a, b1, w2, b2 = params
    x = jnp.maximum(state @ w0 + b0, 0.0)
    x = jnp.maximum(jnp.concatenate([x, action], axis=1)
                    @ jnp.concatenate([w1x, w1a], axis=0) + b1, 0.0)
    return x @ w2 + b2


if __name__ == "__main__":
    key = jax.random.PRNGKey(0)
    k_state, k_action, k_params, k_state2, k_action2 = jax.random.split(key, 5)

    OBS = 16          # obs_space_size
    ACT = 4           # action_space_size
    HIDDEN = [32, 32]
    params = make_params(k_params, OBS, ACT, HIDDEN)

    # Case 1: small batch (single grid step).
    B1 = 8
    state1 = jax.random.normal(k_state, (B1, OBS), jnp.float32)
    action1 = jax.random.normal(k_action, (B1, ACT), jnp.float32)
    out1 = jax.block_until_ready(ddpg_value_forward(state1, action1, params))
    ref1 = reference_forward(state1, action1, params)
    assert out1.shape == (B1, 1)
    assert jnp.allclose(out1, ref1, atol=2e-2, rtol=2e-2), "mismatch vs reference (B=8)"

    # Case 2: multi-tile grid with ragged batch (exercises padding + pipelining).
    B2 = 100
    state2 = jax.random.normal(k_state2, (B2, OBS), jnp.float32)
    action2 = jax.random.normal(k_action2, (B2, ACT), jnp.float32)
    out2 = jax.block_until_ready(
        ddpg_value_forward(state2, action2, params, block_b=32))
    ref2 = reference_forward(state2, action2, params)
    assert out2.shape == (B2, 1)
    assert jnp.allclose(out2, ref2, atol=2e-2, rtol=2e-2), "mismatch vs reference (B=100)"

    print("KERNEL_OK")
</pallas_src>

<mosaic_0001>
module attributes {stable_mosaic.version = 11 : i64} {
  func.func @_ddpg_value_kernel(%arg0: i32, %arg1: memref<16x16xbf16, #tpu.memory_space<vmem>>, %arg2: memref<16x4xbf16, #tpu.memory_space<vmem>>, %arg3: memref<16x32xbf16, #tpu.memory_space<vmem>>, %arg4: memref<32x32xbf16, #tpu.memory_space<vmem>>, %arg5: memref<4x32xbf16, #tpu.memory_space<vmem>>, %arg6: memref<1x97xf32, #tpu.memory_space<vmem>>, %arg7: memref<16x1xf32, #tpu.memory_space<vmem>>) attributes {dimension_semantics = [#tpu.dimension_semantics<parallel>], iteration_bounds = array<i64: 1>, scalar_prefetch = 0 : i64, scratch_operands = 0 : i64, tpu.core_type = #tpu.core_type<tc>, window_params = [{transform_indices = @transform_0, window_bounds = array<i64: 16, 16>}, {transform_indices = @transform_1, window_bounds = array<i64: 16, 4>}, {pipeline_mode = #tpu.pipeline_mode<synchronous>, transform_indices = @transform_2, window_bounds = array<i64: 16, 32>}, {pipeline_mode = #tpu.pipeline_mode<synchronous>, transform_indices = @transform_3, window_bounds = array<i64: 32, 32>}, {pipeline_mode = #tpu.pipeline_mode<synchronous>, transform_indices = @transform_4, window_bounds = array<i64: 4, 32>}, {pipeline_mode = #tpu.pipeline_mode<synchronous>, transform_indices = @transform_5, window_bounds = array<i64: 1, 97>}, {transform_indices = @transform_6, window_bounds = array<i64: 16, 1>}]} {
    %c0 = arith.constant 0 : index
    %c0_0 = arith.constant 0 : index
    %0 = vector.load %arg6[%c0, %c0_0] : memref<1x97xf32, #tpu.memory_space<vmem>>, vector<1x97xf32>
    %1 = vector.extract_strided_slice %0 {offsets = [0, 0], sizes = [1, 32], strides = [1, 1]} : vector<1x97xf32> to vector<1x32xf32>
    %2 = vector.extract_strided_slice %0 {offsets = [0, 32], sizes = [1, 32], strides = [1, 1]} : vector<1x97xf32> to vector<1x32xf32>
    %3 = vector.extract_strided_slice %0 {offsets = [0, 64], sizes = [1, 32], strides = [1, 1]} : vector<1x97xf32> to vector<1x32xf32>
    %4 = vector.extract_strided_slice %0 {offsets = [0, 96], sizes = [1, 1], strides = [1, 1]} : vector<1x97xf32> to vector<1x1xf32>
    %c0_1 = arith.constant 0 : index
    %c0_2 = arith.constant 0 : index
    %5 = vector.load %arg1[%c0_1, %c0_2] : memref<16x16xbf16, #tpu.memory_space<vmem>>, vector<16x16xbf16>
    %c0_3 = arith.constant 0 : index
    %c0_4 = arith.constant 0 : index
    %6 = vector.load %arg3[%c0_3, %c0_4] : memref<16x32xbf16, #tpu.memory_space<vmem>>, vector<16x32xbf16>
    %cst = arith.constant dense<0.000000e+00> : vector<16x32xf32>
    %7 = tpu.matmul %5, %6, %cst {dimension_numbers = #tpu.dot_dimension_numbers<[1], [0], [0], [1], [0, 0, 1, 1], [], []>} : vector<16x16xbf16>, vector<16x32xbf16>, vector<16x32xf32> -> vector<16x32xf32>
    %8 = vector.broadcast %1 : vector<1x32xf32> to vector<16x32xf32>
    %9 = arith.addf %7, %8 : vector<16x32xf32>
    %cst_5 = arith.constant 0.000000e+00 : f32
    %10 = vector.broadcast %cst_5 : f32 to vector<16x32xf32>
    %11 = arith.maximumf %9, %10 : vector<16x32xf32>
    %12 = arith.truncf %11 : vector<16x32xf32> to vector<16x32xbf16>
    %c0_6 = arith.constant 0 : index
    %c0_7 = arith.constant 0 : index
    %13 = vector.load %arg4[%c0_6, %c0_7] : memref<32x32xbf16, #tpu.memory_space<vmem>>, vector<32x32xbf16>
    %cst_8 = arith.constant dense<0.000000e+00> : vector<16x32xf32>
    %14 = tpu.matmul %12, %13, %cst_8 {dimension_numbers = #tpu.dot_dimension_numbers<[1], [0], [0], [1], [0, 0, 1, 1], [], []>} : vector<16x32xbf16>, vector<32x32xbf16>, vector<16x32xf32> -> vector<16x32xf32>
    %c0_9 = arith.constant 0 : index
    %c0_10 = arith.constant 0 : index
    %15 = vector.load %arg2[%c0_9, %c0_10] : memref<16x4xbf16, #tpu.memory_space<vmem>>, vector<16x4xbf16>
    %c0_11 = arith.constant 0 : index
    %c0_12 = arith.constant 0 : index
    %16 = vector.load %arg5[%c0_11, %c0_12] : memref<4x32xbf16, #tpu.memory_space<vmem>>, vector<4x32xbf16>
    %cst_13 = arith.constant dense<0.000000e+00> : vector<16x32xf32>
    %17 = tpu.matmul %15, %16, %cst_13 {dimension_numbers = #tpu.dot_dimension_numbers<[1], [0], [0], [1], [0, 0, 1, 1], [], []>} : vector<16x4xbf16>, vector<4x32xbf16>, vector<16x32xf32> -> vector<16x32xf32>
    %18 = arith.addf %14, %17 : vector<16x32xf32>
    %19 = vector.broadcast %2 : vector<1x32xf32> to vector<16x32xf32>
    %20 = arith.addf %18, %19 : vector<16x32xf32>
    %cst_14 = arith.constant 0.000000e+00 : f32
    %21 = vector.broadcast %cst_14 : f32 to vector<16x32xf32>
    %22 = arith.maximumf %20, %21 : vector<16x32xf32>
    %23 = vector.broadcast %3 : vector<1x32xf32> to vector<16x32xf32>
    %24 = arith.mulf %22, %23 : vector<16x32xf32>
    %cst_15 = arith.constant dense<0.000000e+00> : vector<16xf32>
    %25 = vector.multi_reduction <add>, %24, %cst_15 [1] : vector<16x32xf32> to vector<16xf32>
    %26 = vector.shape_cast %25 : vector<16xf32> to vector<16x1xf32>
    %27 = vector.broadcast %4 : vector<1x1xf32> to vector<16x1xf32>
    %28 = arith.addf %26, %27 : vector<16x1xf32>
    %c0_16 = arith.constant 0 : index
    %c0_17 = arith.constant 0 : index
    %29 = vector.load %arg7[%c0_16, %c0_17] : memref<16x1xf32, #tpu.memory_space<vmem>>, vector<16x1xf32>
    tpu.vector_store %arg7[%c0_16, %c0_17], %28 {strides = array<i32>} : memref<16x1xf32, #tpu.memory_space<vmem>>, vector<16x1xf32>,
    return
  }
  func.func @transform_0(%arg0: i32) -> (i32, i32) {
    %c0_i32 = arith.constant 0 : i32
    %c0_i32_0 = arith.constant 0 : i32
    return %arg0, %c0_i32 : i32, i32
  }
  func.func @transform_1(%arg0: i32) -> (i32, i32) {
    %c0_i32 = arith.constant 0 : i32
    %c0_i32_0 = arith.constant 0 : i32
    return %arg0, %c0_i32 : i32, i32
  }
  func.func @transform_2(%arg0: i32) -> (i32, i32) {
    %c0_i32 = arith.constant 0 : i32
    %c0_i32_0 = arith.constant 0 : i32
    %c0_i32_1 = arith.constant 0 : i32
    return %c0_i32, %c0_i32_0 : i32, i32
  }
  func.func @transform_3(%arg0: i32) -> (i32, i32) {
    %c0_i32 = arith.constant 0 : i32
    %c0_i32_0 = arith.constant 0 : i32
    %c0_i32_1 = arith.constant 0 : i32
    return %c0_i32, %c0_i32_0 : i32, i32
  }
  func.func @transform_4(%arg0: i32) -> (i32, i32) {
    %c0_i32 = arith.constant 0 : i32
    %c0_i32_0 = arith.constant 0 : i32
    %c0_i32_1 = arith.constant 0 : i32
    return %c0_i32, %c0_i32_0 : i32, i32
  }
  func.func @transform_5(%arg0: i32) -> (i32, i32) {
    %c0_i32 = arith.constant 0 : i32
    %c0_i32_0 = arith.constant 0 : i32
    %c0_i32_1 = arith.constant 0 : i32
    return %c0_i32, %c0_i32_0 : i32, i32
  }
  func.func @transform_6(%arg0: i32) -> (i32, i32) {
    %c0_i32 = arith.constant 0 : i32
    %c0_i32_0 = arith.constant 0 : i32
    return %arg0, %c0_i32 : i32, i32
  }
}

</mosaic_0001>

<llo_original>
// kernel: tpu_custom_call.1
$region0: #{tpu_custom_call.1}
  #allocation0 [shape = 'u32[]', space=smem, size = 0x4, offset = 0x4, fixed_abs, tag = 'smem constant byte address 0x4 - core index']
  #allocation1 [shape = 'u32[144,128]{1,0:T(1,128)}', space=vmem, size = 0x12000, scoped, tag = 'internal scratch']
  %s0 = inlined_call_operand.hbm [shape: bf16[16,16], index: 0, kind: input, shape index: {}]
  %s1 = inlined_call_operand.vmem [shape: bf16[16,4], index: 1, kind: input, shape index: {}]
  %s2 = inlined_call_operand.hbm [shape: bf16[16,32], index: 2, kind: input, shape index: {}]
  %s3 = inlined_call_operand.vmem [shape: bf16[32,32], index: 3, kind: input, shape index: {}]
  %s4 = inlined_call_operand.vmem [shape: bf16[4,32], index: 4, kind: input, shape index: {}]
  %s5 = inlined_call_operand.vmem [shape: f32[1,97], index: 5, kind: input, shape index: {}]
  %s6 = inlined_call_operand.vmem [shape: f32[16,1], index: 6, kind: output, shape index: {}]
  %s7 = sld [smem:[#allocation0]]
  $region42: #{tpu_custom_call.1} parent=0
    _
  %s9 = ssub.s32 1, %s7
  %s10 = scalar_select 0, %s9, %s7
  $region1: #{tpu_custom_call.1} parent=0
    #allocation2 [shape = 'u8[4096]{0}', space=vmem, size = 0x1000, scoped, tag = 'input window, operand 0, single buffered']
    #allocation3 [shape = 's32[1]{0}', space=sflag, size = 0x4, scoped, tag = 'scoped memory for tpu_custom_call.1']
    #allocation4 [shape = 'u8[4096]{0}', space=vmem, size = 0x1000, scoped, tag = 'input window, operand 2, single buffered']
    #allocation5 [shape = 's32[1]{0}', space=sflag, size = 0x4, scoped, tag = 'scoped memory for tpu_custom_call.1']
    %11 = vsyncpa [#allocation3], 0
    %12 = vsyncpa [#allocation5], 0
    // Predicated region
    $region2: #{tpu_custom_call.1} parent=1 // pred_check
      _
    $region3: #{tpu_custom_call.1} parent=1 // pred_check_branch
      %14 = sbr.rel (0) target = $region5
    $region4: #{tpu_custom_call.1} parent=1 // pred_region
      %s16 = ssub.s32 128, 128
      %17 = vsyncadd [#allocation3], %s16
      %s18 = sshll.u32 [#allocation2], 4
      %s19 = int_to_ptr.vmem [resolvable:$true] %s18
      %24 = dma.hbm_to_vmem [thread:$0]  %s0, 128, %s19, [#allocation3], 64, 64, 4
    $region5: #{tpu_custom_call.1} parent=1 // pred_fallthru
      _
    // Predicated region
    $region6: #{tpu_custom_call.1} parent=1 // pred_check
      _
    $region7: #{tpu_custom_call.1} parent=1 // pred_check_branch
      %26 = sbr.rel (0) target = $region9
    $region8: #{tpu_custom_call.1} parent=1 // pred_region
      _
    $region9: #{tpu_custom_call.1} parent=1 // pred_fallthru
      _
    // Predicated region
    $region10: #{tpu_custom_call.1} parent=1 // pred_check
      _
    $region11: #{tpu_custom_call.1} parent=1 // pred_check_branch
      %28 = sbr.rel (0) target = $region13
    $region12: #{tpu_custom_call.1} parent=1 // pred_region
      %s30 = ssub.s32 128, 128
      %31 = vsyncadd [#allocation5], %s30
      %s32 = sshll.u32 [#allocation4], 4
      %s33 = int_to_ptr.vmem [resolvable:$true] %s32
      %38 = dma.hbm_to_vmem [thread:$0]  %s2, 128, %s33, [#allocation5], 64, 64, 4
    $region13: #{tpu_custom_call.1} parent=1 // pred_fallthru
      _
    // Predicated region
    $region14: #{tpu_custom_call.1} parent=1 // pred_check
      _
    $region15: #{tpu_custom_call.1} parent=1 // pred_check_branch
      %40 = sbr.rel (0) target = $region17
    $region16: #{tpu_custom_call.1} parent=1 // pred_region
      _
    $region17: #{tpu_custom_call.1} parent=1 // pred_fallthru
      _
    // Predicated region
    $region18: #{tpu_custom_call.1} parent=1 // pred_check
      _
    $region19: #{tpu_custom_call.1} parent=1 // pred_check_branch
      %42 = sbr.rel (0) target = $region21
    $region20: #{tpu_custom_call.1} parent=1 // pred_region
      _
    $region21: #{tpu_custom_call.1} parent=1 // pred_fallthru
      _
    // Predicated region
    $region22: #{tpu_custom_call.1} parent=1 // pred_check
      _
    $region23: #{tpu_custom_call.1} parent=1 // pred_check_branch
      %44 = sbr.rel (0) target = $region25
    $region24: #{tpu_custom_call.1} parent=1 // pred_region
      _
    $region25: #{tpu_custom_call.1} parent=1 // pred_fallthru
      _
    // Predicated region
    $region26: #{tpu_custom_call.1} parent=1 // pred_check
      _
    $region27: #{tpu_custom_call.1} parent=1 // pred_check_branch
      %46 = sbr.rel (0) target = $region29
    $region28: #{tpu_custom_call.1} parent=1 // pred_region
      %47 = dma.done [#allocation3], 128
    $region29: #{tpu_custom_call.1} parent=1 // pred_fallthru
      _
    // Predicated region
    $region30: #{tpu_custom_call.1} parent=1 // pred_check
      _
    $region31: #{tpu_custom_call.1} parent=1 // pred_check_branch
      %49 = sbr.rel (0) target = $region33
    $region32: #{tpu_custom_call.1} parent=1 // pred_region
      %50 = dma.done [#allocation5], 128
    $region33: #{tpu_custom_call.1} parent=1 // pred_fallthru
      _
    %v52 = vld [vmem:[%s5] sm:$0x1]
    %v53 = vld [vmem:[#allocation2] sm:$0xf]
    %v54 = vld [vmem:[#allocation2 + $0x4] sm:$0xf]
    %v55 = vld [vmem:[#allocation4] sm:$0xf]
    %v56 = vld [vmem:[#allocation4 + $0x4] sm:$0xf]
    %v58 = vlaneseq
    %v59 = vshrl.u32 %v58, 7
    %v60 = vsub.s32 0, %v59
    %v61 = vrot.slane %v52, %v60
    %v65 = vunpack.c.l.b16 %v53
    %v66 = vunpack.c.l.b16 %v54
    %v67 = vpack.c.b16 %v66, %v65
    %v70 = vunpack.c.l.b16 %v55
    %v71 = vunpack.c.l.b16 %v56
    %v72 = vpack.c.b16 %v71, %v70
    %vm74 = vcmask 130048
    %v76 = vsel %vm74, %v67, 0
    %78 = vmatprep.subr.bf16.mxu0 0
    %79 = vmatpush1.bf16.msra.mxu0 %v72
    %80 = vmatprep.subr.bf16.mxu0 0
    %81 = vmatpush1.bf16.msra.mxu0 0
    %82 = vmatprep.subr.bf16.mxu0 0
    %83 = vmatpush1.bf16.msra.mxu0 0
    %84 = vmatprep.subr.bf16.mxu0 0
    %85 = vmatpush1.bf16.msra.mxu0 0
    %86 = vmatprep.subr.bf16.mxu0 0
    %87 = vmatpush1.bf16.msra.mxu0 0
    %88 = vmatprep.subr.bf16.mxu0 0
    %89 = vmatpush1.bf16.msra.mxu0 0
    %90 = vmatprep.subr.bf16.mxu0 0
    %91 = vmatpush1.bf16.msra.mxu0 0
    %92 = vmatprep.subr.bf16.mxu0 0
    %93 = vmatpush1.bf16.msra.mxu0 0
    %94 = vmatprep.subr.bf16.mxu0 0
    %95 = vmatpush1.bf16.msra.mxu0 0
    %96 = vmatprep.subr.bf16.mxu0 0
    %97 = vmatpush1.bf16.msra.mxu0 0
    %98 = vmatprep.subr.bf16.mxu0 0
    %99 = vmatpush1.bf16.msra.mxu0 0
    %100 = vmatprep.subr.bf16.mxu0 0
    %101 = vmatpush1.bf16.msra.mxu0 0
    %102 = vmatprep.subr.bf16.mxu0 0
    %103 = vmatpush1.bf16.msra.mxu0 0
    %104 = vmatprep.subr.bf16.mxu0 0
    %105 = vmatpush1.bf16.msra.mxu0 0
    %106 = vmatprep.subr.bf16.mxu0 0
    %107 = vmatpush1.bf16.msra.mxu0 0
    %108 = vmatprep.subr.bf16.mxu0 0
    %109 = vmatpush1.bf16.msra.mxu0 0
    %110 = vmatprep.mubr.bf16.mxu0 0
    %111 = vmatmul.mubr.bf16.gmra.mrb[0].mxu0 %v76
    %v112 = vpop.f32.mrb[0].mxu0
    %v113 = vadd.f32 %v61, %v112
    %v114 = vpop.f32.mrb[0].mxu0
    %v115 = vpop.f32.mrb[0].mxu0
    %v116 = vadd.f32 %v61, %v115
    %v117 = vpop.f32.mrb[0].mxu0
    %118 = vdwg.mxu0
    %v119 = vmax.f32 %v113, 0.0
    %v120 = vmax.f32 %v116, 0.0
    %v121 = vpack.c.bf16 %v120, %v119
    %v122 = vld [vmem:[%s3] sm:$0xf]
    %v123 = vld [vmem:[%s3 + $0x4] sm:$0xf]
    %v124 = vld [vmem:[%s3 + $0x8] sm:$0xf]
    %v125 = vld [vmem:[%s3 + $0xc] sm:$0xf]
    %v126 = vld [vmem:[%s1] sm:$0xf]
    %v127 = vld [vmem:[%s1 + $0x4] sm:$0xf]
    %v128 = vld [vmem:[%s4] sm:$0x3]
    %v131 = vunpack.c.l.b16 %v126
    %v132 = vunpack.c.l.b16 %v127
    %v133 = vpack.c.b16 %v132, %v131
    %vm134 = vcmask 31744
    %v136 = vsel %vm134, %v133, 0
    %vm138 = vcmask 1041408
    %v140 = vsel %vm138, %v128, 0
    %142 = vmatprep.subr.bf16.mxu0 0
    %143 = vmatpush1.bf16.msra.mxu0 %v140
    %144 = vmatprep.subr.bf16.mxu0 0
    %145 = vmatpush1.bf16.msra.mxu0 0
    %146 = vmatprep.subr.bf16.mxu0 0
    %147 = vmatpush1.bf16.msra.mxu0 0
    %148 = vmatprep.subr.bf16.mxu0 0
    %149 = vmatpush1.bf16.msra.mxu0 0
    %150 = vmatprep.subr.bf16.mxu0 0
    %151 = vmatpush1.bf16.msra.mxu0 0
    %152 = vmatprep.subr.bf16.mxu0 0
    %153 = vmatpush1.bf16.msra.mxu0 0
    %154 = vmatprep.subr.bf16.mxu0 0
    %155 = vmatpush1.bf16.msra.mxu0 0
    %156 = vmatprep.subr.bf16.mxu0 0
    %157 = vmatpush1.bf16.msra.mxu0 0
    %158 = vmatprep.subr.bf16.mxu0 0
    %159 = vmatpush1.bf16.msra.mxu0 0
    %160 = vmatprep.subr.bf16.mxu0 0
    %161 = vmatpush1.bf16.msra.mxu0 0
    %162 = vmatprep.subr.bf16.mxu0 0
    %163 = vmatpush1.bf16.msra.mxu0 0
    %164 = vmatprep.subr.bf16.mxu0 0
    %165 = vmatpush1.bf16.msra.mxu0 0
    %166 = vmatprep.subr.bf16.mxu0 0
    %167 = vmatpush1.bf16.msra.mxu0 0
    %168 = vmatprep.subr.bf16.mxu0 0
    %169 = vmatpush1.bf16.msra.mxu0 0
    %170 = vmatprep.subr.bf16.mxu0 0
    %171 = vmatpush1.bf16.msra.mxu0 0
    %172 = vmatprep.subr.bf16.mxu0 0
    %173 = vmatpush1.bf16.msra.mxu0 0
    %174 = vmatprep.mubr.bf16.mxu0 0
    %175 = vmatmul.mubr.bf16.gmra.mrb[0].mxu0 %v136
    %v176 = vpop.f32.mrb[0].mxu0
    %v177 = vadd.f32 0.0, %v176
    %v178 = vpop.f32.mrb[0].mxu0
    %v179 = vpop.f32.mrb[0].mxu0
    %v180 = vadd.f32 0.0, %v179
    %v181 = vpop.f32.mrb[0].mxu0
    %182 = vdwg.mxu0
    %v187 = vunpack.c.l.b16 %v122
    %v188 = vunpack.c.l.b16 %v123
    %v189 = vunpack.c.l.b16 %v124
    %v190 = vunpack.c.l.b16 %v125
    %v191 = vpack.c.b16 %v188, %v187
    %v192 = vpack.c.b16 %v190, %v189
    %vm195 = vcmask 261120
    %v197 = vsel %vm195, %v121, 0
    %199 = vmatprep.subr.bf16.mxu0 0
    %200 = vmatpush1.bf16.msra.mxu0 %v191
    %201 = vmatprep.subr.bf16.mxu0 0
    %202 = vmatpush1.bf16.msra.mxu0 %v192
    %203 = vmatprep.subr.bf16.mxu0 0
    %204 = vmatpush1.bf16.msra.mxu0 0
    %205 = vmatprep.subr.bf16.mxu0 0
    %206 = vmatpush1.bf16.msra.mxu0 0
    %207 = vmatprep.subr.bf16.mxu0 0
    %208 = vmatpush1.bf16.msra.mxu0 0
    %209 = vmatprep.subr.bf16.mxu0 0
    %210 = vmatpush1.bf16.msra.mxu0 0
    %211 = vmatprep.subr.bf16.mxu0 0
    %212 = vmatpush1.bf16.msra.mxu0 0
    %213 = vmatprep.subr.bf16.mxu0 0
    %214 = vmatpush1.bf16.msra.mxu0 0
    %215 = vmatprep.subr.bf16.mxu0 0
    %216 = vmatpush1.bf16.msra.mxu0 0
    %217 = vmatprep.subr.bf16.mxu0 0
    %218 = vmatpush1.bf16.msra.mxu0 0
    %219 = vmatprep.subr.bf16.mxu0 0
    %220 = vmatpush1.bf16.msra.mxu0 0
    %221 = vmatprep.subr.bf16.mxu0 0
    %222 = vmatpush1.bf16.msra.mxu0 0
    %223 = vmatprep.subr.bf16.mxu0 0
    %224 = vmatpush1.bf16.msra.mxu0 0
    %225 = vmatprep.subr.bf16.mxu0 0
    %226 = vmatpush1.bf16.msra.mxu0 0
    %227 = vmatprep.subr.bf16.mxu0 0
    %228 = vmatpush1.bf16.msra.mxu0 0
    %229 = vmatprep.subr.bf16.mxu0 0
    %230 = vmatpush1.bf16.msra.mxu0 0
    %231 = vmatprep.mubr.bf16.mxu0 0
    %232 = vmatmul.mubr.bf16.gmra.mrb[0].mxu0 %v197
    %v233 = vpop.f32.mrb[0].mxu0
    %v234 = vadd.f32 %v177, %v233
    %v235 = vpop.f32.mrb[0].mxu0
    %v236 = vpop.f32.mrb[0].mxu0
    %v237 = vadd.f32 %v180, %v236
    %v238 = vpop.f32.mrb[0].mxu0
    %239 = vdwg.mxu0
    %240 = vrot.lane.b32.xlu0 %v61, 96
    %v241 = vpop.permute.xlu0 %240
    %v243 = vadd.f32 %v234, %v241
    %v244 = vadd.f32 %v237, %v241
    %v245 = vmax.f32 %v243, 0.0
    %v246 = vmax.f32 %v244, 0.0
    %247 = vrot.lane.b32.xlu0 %v61, 64
    %v248 = vpop.permute.xlu0 %247
    %v250 = vmul.f32 %v245, %v248
    %v251 = vmul.f32 %v246, %v248
    %v252 = vsel %vm195, %v250, 0.0
    %253 = vadd.xlane.f32.xlu0 %v252
    %v254 = vpop.xlane.xlu0 %253
    %v255 = vsel %vm195, %v251, 0.0
    %256 = vadd.xlane.f32.xlu0 %v255
    %v257 = vpop.xlane.xlu0 %256
    %v258 = vadd.f32 %v254, %v61
    %v259 = vadd.f32 %v257, %v61
    %262 = vrot.lane.b32.xlu0 %v258, 32
    %v263 = vpop.permute.xlu0 %262
    %264 = vrot.lane.b32.xlu0 %v259, 32
    %v265 = vpop.permute.xlu0 %264
    %vm268 = vcmask 7168
    %269 = vst.msk [vmem:[%s6] sm:$0xff] %vm268, %v263
    %270 = vst.msk [vmem:[%s6 + $0x8] sm:$0xff] %vm268, %v265
    // Predicated region
    $region34: #{tpu_custom_call.1} parent=1 // pred_check
      _
    $region35: #{tpu_custom_call.1} parent=1 // pred_check_branch
      %272 = sbr.rel (0) target = $region37
    $region36: #{tpu_custom_call.1} parent=1 // pred_region
      _
    $region37: #{tpu_custom_call.1} parent=1 // pred_fallthru
      _
    // Predicated region
    $region38: #{tpu_custom_call.1} parent=1 // pred_check
      _
    $region39: #{tpu_custom_call.1} parent=1 // pred_check_branch
      %274 = sbr.rel (0) target = $region41
    $region40: #{tpu_custom_call.1} parent=1 // pred_region
      _
    $region41: #{tpu_custom_call.1} parent=1 // pred_fallthru
      _
    %275 = vsyncpa [#allocation3], 1
    %276 = vsyncpa [#allocation5], 1

</llo_original>
